<compile_context>
chip_gen: v7x
topology: tpu7x:2x2x1
jax: 0.10.0
libtpu: 0.0.40
codegen_flags: <defaults>
</compile_context>

<pallas_src>
import jax
import jax.numpy as jnp
from jax.experimental import pallas as pl
from jax.experimental.pallas import tpu as pltpu


def _self_attn_agg_kernel(x_ref, mask_ref, w_ref, b_ref, o_ref):
    # x_ref:    (TB, T, Dp)  x's native dtype (f32 or bf16)
    # mask_ref: (TB, T)      f32
    # w_ref:    (1, Dp)      f32   (nn.Linear(D, 1).weight, zero-padded)
    # b_ref:    (1,)         f32   (nn.Linear(D, 1).bias, in SMEM)
    # o_ref:    (TB, Dp)     x's native dtype
    xb = x_ref[...]
    mask = mask_ref[...]
    w = w_ref[...]                                     # (1, Dp) f32
    b = b_ref[0]

    # ---- attention logits: Linear(D -> 1), squeezed -> (TB, T) ----
    # Small D-reduction; kept on VPU+XLU (it is the only XLU consumer now
    # that the large T-reduction below runs on the MXU).
    logits = jnp.sum(xb.astype(jnp.float32) * w[None, :, :], axis=-1) + b

    # ---- masked_softmax (classic AllenNLP semantics) ----
    masked_logits = logits * mask                      # (TB, T)
    m = jnp.max(masked_logits, axis=-1, keepdims=True)
    p = jnp.exp(masked_logits - m)
    probs = p / jnp.sum(p, axis=-1, keepdims=True)     # softmax(logits*mask)
    probs = probs * mask
    probs = probs / (jnp.sum(probs, axis=-1, keepdims=True) + 1e-13)

    # ---- weighted_sum on the MXU: (TB,1,T) @ (TB,T,Dp) -> (TB,1,Dp) ----
    probs_b = probs.astype(xb.dtype)[:, None, :]
    pooled = jnp.einsum("bqt,btd->bqd", probs_b, xb,
                        preferred_element_type=jnp.float32)
    o_ref[...] = pooled[:, 0, :].astype(o_ref.dtype)


def _batch_tile(batch, tokens, dim_p, itemsize, requested=None):
    """Pick the batch tile TB.

    Target ~2 MiB x-blocks so 2x double-buffering plus the f32 logit
    temporary fits comfortably inside every generation's default scoped VMEM
    (16 MiB v5e / 32 MiB v6e,v7x).  When tiling (TB < B) TB must be a
    multiple of 8 (sublane alignment of the mask / output blocks).
    """
    if requested is None:
        target_bytes = 2 * 1024 * 1024
        requested = max(1, target_bytes // (tokens * dim_p * itemsize))
    requested = int(requested)
    if requested >= batch:
        return batch
    tb = max(8, (requested // 8) * 8)
    return batch if tb >= batch else tb


def self_attn_aggregator(x, mask, weight, bias, *, block_b=None):
    """x: (B, T, D); mask: (B, T); weight: (1, D); bias: (1,). Returns (B, D)."""
    B, T, D = x.shape
    out_dtype = x.dtype

    # Lane-align D (zero padding is exact: padded weight columns are zero so
    # the logits are unchanged; padded output columns are zero & sliced off).
    Dp = ((D + 127) // 128) * 128
    w2 = jnp.pad(weight.reshape(1, D).astype(jnp.float32),
                 ((0, 0), (0, Dp - D)))
    b1 = bias.reshape(1).astype(jnp.float32)
    mask_f = mask.astype(jnp.float32)
    if Dp != D:
        x = jnp.pad(x, ((0, 0), (0, 0), (0, Dp - D)))

    TB = _batch_tile(B, T, Dp, x.dtype.itemsize, block_b)
    Bp = pl.cdiv(B, TB) * TB
    if Bp != B:
        # Padded batch rows carry an all-zero mask -> probs collapse to
        # exactly 0 (the +1e-13 renorm) -> pooled rows are 0, sliced off.
        x = jnp.pad(x, ((0, Bp - B), (0, 0), (0, 0)))
        mask_f = jnp.pad(mask_f, ((0, Bp - B), (0, 0)))

    out = pl.pallas_call(
        _self_attn_agg_kernel,
        out_shape=jax.ShapeDtypeStruct((Bp, Dp), out_dtype),
        grid=(Bp // TB,),
        in_specs=[
            pl.BlockSpec((TB, T, Dp), lambda i: (i, 0, 0)),   # x (streamed)
            pl.BlockSpec((TB, T), lambda i: (i, 0)),          # mask
            pl.BlockSpec((1, Dp), lambda i: (0, 0)),          # weight (resident)
            pl.BlockSpec(memory_space=pltpu.MemorySpace.SMEM),  # bias scalar
        ],
        out_specs=pl.BlockSpec((TB, Dp), lambda i: (i, 0)),
        compiler_params=pltpu.CompilerParams(
            dimension_semantics=("parallel",)),
    )(x, mask_f, w2, b1)

    return out[:B, :D]


def _reference(x, mask, weight, bias):
    """Pure-JAX reference for the PyTorch forward."""
    xf = x.astype(jnp.float32)
    logits = jnp.einsum("btd,od->bt", xf, weight.astype(jnp.float32))
    logits = logits + bias.astype(jnp.float32)[0]
    masked_logits = logits * mask
    probs = jax.nn.softmax(masked_logits, axis=-1)
    probs = probs * mask
    probs = probs / (jnp.sum(probs, axis=-1, keepdims=True) + 1e-13)
    return jnp.einsum("bt,btd->bd", probs, xf)


if __name__ == "__main__":
    B, T, D = 2, 8, 32  # batch, num_tokens, input_dim == output_dim

    key = jax.random.PRNGKey(0)
    kx, kw, kb = jax.random.split(key, 3)

    x = jax.random.normal(kx, (B, T, D), dtype=jnp.float32)
    # Deterministic Linear(D, 1) parameters (shapes from nn.Linear(output_dim, 1)).
    weight = jax.random.normal(kw, (1, D), dtype=jnp.float32) * 0.1
    bias = jax.random.normal(kb, (1,), dtype=jnp.float32) * 0.1
    # Sentence mask: 1.0 for valid tokens, 0.0 for padding.
    lengths = jnp.array([T, T // 2])
    mask = (jnp.arange(T)[None, :] < lengths[:, None]).astype(jnp.float32)

    out = jax.block_until_ready(self_attn_aggregator(x, mask, weight, bias))
    ref = _reference(x, mask, weight, bias)
    assert out.shape == (B, D)
    assert jnp.allclose(out, ref, atol=1e-5, rtol=1e-5), (out, ref)

    # Second config: exercises batch tiling + batch padding (B=12, TB=8 -> Bp=16).
    B2 = 12
    x2 = jax.random.normal(jax.random.PRNGKey(1), (B2, T, D), dtype=jnp.float32)
    lengths2 = jnp.arange(1, B2 + 1) % T + 1
    mask2 = (jnp.arange(T)[None, :] < lengths2[:, None]).astype(jnp.float32)
    out2 = jax.block_until_ready(
        self_attn_aggregator(x2, mask2, weight, bias, block_b=8))
    ref2 = _reference(x2, mask2, weight, bias)
    assert out2.shape == (B2, D)
    assert jnp.allclose(out2, ref2, atol=1e-5, rtol=1e-5), (out2, ref2)

    print("KERNEL_OK")
</pallas_src>

<mosaic_0001>
module attributes {stable_mosaic.version = 11 : i64} {
  func.func @_self_attn_agg_kernel(%arg0: i32, %arg1: memref<2x8x128xf32, #tpu.memory_space<vmem>>, %arg2: memref<2x8xf32, #tpu.memory_space<vmem>>, %arg3: memref<1x128xf32, #tpu.memory_space<vmem>>, %arg4: memref<1xf32, #tpu.memory_space<smem>>, %arg5: memref<2x128xf32, #tpu.memory_space<vmem>>) attributes {dimension_semantics = [#tpu.dimension_semantics<parallel>], iteration_bounds = array<i64: 1>, scalar_prefetch = 0 : i64, scratch_operands = 0 : i64, tpu.core_type = #tpu.core_type<tc>, window_params = [{transform_indices = @transform_0, window_bounds = array<i64: 2, 8, 128>}, {transform_indices = @transform_1, window_bounds = array<i64: 2, 8>}, {pipeline_mode = #tpu.pipeline_mode<synchronous>, transform_indices = @transform_2, window_bounds = array<i64: 1, 128>}, {transform_indices = @transform_3, window_bounds = array<i64: 1>}, {transform_indices = @transform_4, window_bounds = array<i64: 2, 128>}]} {
    %c0 = arith.constant 0 : index
    %c0_0 = arith.constant 0 : index
    %c0_1 = arith.constant 0 : index
    %0 = vector.load %arg1[%c0, %c0_0, %c0_1] : memref<2x8x128xf32, #tpu.memory_space<vmem>>, vector<2x8x128xf32>
    %c0_2 = arith.constant 0 : index
    %c0_3 = arith.constant 0 : index
    %1 = vector.load %arg2[%c0_2, %c0_3] : memref<2x8xf32, #tpu.memory_space<vmem>>, vector<2x8xf32>
    %c0_4 = arith.constant 0 : index
    %c0_5 = arith.constant 0 : index
    %2 = vector.load %arg3[%c0_4, %c0_5] : memref<1x128xf32, #tpu.memory_space<vmem>>, vector<1x128xf32>
    %c0_6 = arith.constant 0 : index
    %3 = memref.load %arg4[%c0_6] : memref<1xf32, #tpu.memory_space<smem>>
    %4 = vector.shape_cast %2 : vector<1x128xf32> to vector<1x1x128xf32>
    %5 = vector.broadcast %4 : vector<1x1x128xf32> to vector<2x8x128xf32>
    %6 = arith.mulf %0, %5 : vector<2x8x128xf32>
    %cst = arith.constant dense<0.000000e+00> : vector<2x8xf32>
    %7 = vector.multi_reduction <add>, %6, %cst [2] : vector<2x8x128xf32> to vector<2x8xf32>
    %8 = vector.broadcast %3 : f32 to vector<2x8xf32>
    %9 = arith.addf %7, %8 : vector<2x8xf32>
    %10 = arith.mulf %9, %1 : vector<2x8xf32>
    %cst_7 = arith.constant dense<0xFF800000> : vector<2xf32>
    %11 = vector.multi_reduction <maximumf>, %10, %cst_7 [1] : vector<2x8xf32> to vector<2xf32>
    %12 = vector.shape_cast %11 : vector<2xf32> to vector<2x1xf32>
    %13 = vector.broadcast %12 : vector<2x1xf32> to vector<2x8xf32>
    %14 = arith.subf %10, %13 : vector<2x8xf32>
    %15 = math.exp %14 : vector<2x8xf32>
    %cst_8 = arith.constant dense<0.000000e+00> : vector<2xf32>
    %16 = vector.multi_reduction <add>, %15, %cst_8 [1] : vector<2x8xf32> to vector<2xf32>
    %17 = vector.shape_cast %16 : vector<2xf32> to vector<2x1xf32>
    %18 = vector.broadcast %17 : vector<2x1xf32> to vector<2x8xf32>
    %19 = arith.divf %15, %18 : vector<2x8xf32>
    %20 = arith.mulf %19, %1 : vector<2x8xf32>
    %cst_9 = arith.constant dense<0.000000e+00> : vector<2xf32>
    %21 = vector.multi_reduction <add>, %20, %cst_9 [1] : vector<2x8xf32> to vector<2xf32>
    %22 = vector.shape_cast %21 : vector<2xf32> to vector<2x1xf32>
    %cst_10 = arith.constant 9.99999982E-14 : f32
    %23 = vector.broadcast %cst_10 : f32 to vector<2x1xf32>
    %24 = arith.addf %22, %23 : vector<2x1xf32>
    %25 = vector.broadcast %24 : vector<2x1xf32> to vector<2x8xf32>
    %26 = arith.divf %20, %25 : vector<2x8xf32>
    %27 = vector.shape_cast %26 : vector<2x8xf32> to vector<2x1x8xf32>
    "tpu.trace_start"() <{level = 10 : i32, message = "bqt,btd->bqd"}> : () -> ()
    %cst_11 = arith.constant dense<0.000000e+00> : vector<2x1x128xf32>
    %28 = tpu.matmul %27, %0, %cst_11 {dimension_numbers = #tpu.dot_dimension_numbers<[2], [1], [1], [2], [0, 0, 0, 1, 1, 2], [0], [0]>} : vector<2x1x8xf32>, vector<2x8x128xf32>, vector<2x1x128xf32> -> vector<2x1x128xf32>
    "tpu.trace_stop"() : () -> ()
    %29 = vector.shape_cast %28 : vector<2x1x128xf32> to vector<2x128xf32>
    %c0_12 = arith.constant 0 : index
    %c0_13 = arith.constant 0 : index
    %30 = vector.load %arg5[%c0_12, %c0_13] : memref<2x128xf32, #tpu.memory_space<vmem>>, vector<2x128xf32>
    tpu.vector_store %arg5[%c0_12, %c0_13], %29 {strides = array<i32>} : memref<2x128xf32, #tpu.memory_space<vmem>>, vector<2x128xf32>,
    return
  }
  func.func @transform_0(%arg0: i32) -> (i32, i32, i32) {
    %c0_i32 = arith.constant 0 : i32
    %c0_i32_0 = arith.constant 0 : i32
    %c0_i32_1 = arith.constant 0 : i32
    return %arg0, %c0_i32, %c0_i32_0 : i32, i32, i32
  }
  func.func @transform_1(%arg0: i32) -> (i32, i32) {
    %c0_i32 = arith.constant 0 : i32
    %c0_i32_0 = arith.constant 0 : i32
    return %arg0, %c0_i32 : i32, i32
  }
  func.func @transform_2(%arg0: i32) -> (i32, i32) {
    %c0_i32 = arith.constant 0 : i32
    %c0_i32_0 = arith.constant 0 : i32
    %c0_i32_1 = arith.constant 0 : i32
    return %c0_i32, %c0_i32_0 : i32, i32
  }
  func.func @transform_3(%arg0: i32) -> i32 {
    %c0_i32 = arith.constant 0 : i32
    %c0_i32_0 = arith.constant 0 : i32
    return %c0_i32 : i32
  }
  func.func @transform_4(%arg0: i32) -> (i32, i32) {
    %c0_i32 = arith.constant 0 : i32
    %c0_i32_0 = arith.constant 0 : i32
    return %arg0, %c0_i32 : i32, i32
  }
}

</mosaic_0001>

<llo_original>
// kernel: tpu_custom_call.1
$region0: #{tpu_custom_call.1}
  #allocation0 [shape = 'u32[]', space=smem, size = 0x4, offset = 0x4, fixed_abs, tag = 'smem constant byte address 0x4 - core index']
  #allocation1 [shape = 'u32[144,128]{1,0:T(1,128)}', space=vmem, size = 0x12000, scoped, tag = 'internal scratch']
  #allocation2 [shape = 'f32[1]{0:T(128)S(6)}', space=smem, size = 0x200, scoped, tag = 'scoped memory for tpu_custom_call.1']
  %s0 = inlined_call_operand.hbm [shape: f32[2,8,128], index: 0, kind: input, shape index: {}]
  %s1 = inlined_call_operand.vmem [shape: f32[2,8], index: 1, kind: input, shape index: {}]
  %s2 = inlined_call_operand.vmem [shape: f32[1,128], index: 2, kind: input, shape index: {}]
  %s3 = inlined_call_operand.<no memory space> [shape: f32[1], index: 3, kind: input, shape index: {}]
  %s4 = inlined_call_operand.hbm [shape: f32[2,128], index: 4, kind: output, shape index: {}]
  %s5 = sld [smem:[#allocation0]]
  $region30: #{tpu_custom_call.1} parent=0
    _
  %s7 = ssub.s32 1, %s5
  %s8 = scalar_select 0, %s7, %s5
  %9 = sst [smem:[#allocation2]] %s3
  $region1: #{tpu_custom_call.1} parent=0
    #allocation3 [shape = 'u8[8192]{0}', space=vmem, size = 0x2000, scoped, tag = 'input window, operand 0, single buffered']
    #allocation4 [shape = 's32[1]{0}', space=sflag, size = 0x4, scoped, tag = 'scoped memory for tpu_custom_call.1']
    #allocation5 [shape = 's32[1]{0}', space=sflag, size = 0x4, scoped, tag = 'scoped memory for tpu_custom_call.1']
    #allocation6 [shape = 'u8[1024]{0}', space=vmem, size = 0x400, scoped, tag = 'output window, operand 0, single buffered']
    %10 = vsyncpa [#allocation4], 0
    %11 = vsyncpa [#allocation5], 0
    // Predicated region
    $region2: #{tpu_custom_call.1} parent=1 // pred_check
      _
    $region3: #{tpu_custom_call.1} parent=1 // pred_check_branch
      %13 = sbr.rel (0) target = $region5
    $region4: #{tpu_custom_call.1} parent=1 // pred_region
      %s15 = ssub.s32 256, 256
      %16 = vsyncadd [#allocation4], %s15
      %s17 = sshll.u32 [#allocation3], 4
      %s18 = int_to_ptr.vmem [resolvable:$true] %s17
      %23 = dma.hbm_to_vmem [thread:$0]  %s0, 256, %s18, [#allocation4], 128, 128, 8
    $region5: #{tpu_custom_call.1} parent=1 // pred_fallthru
      _
    // Predicated region
    $region6: #{tpu_custom_call.1} parent=1 // pred_check
      _
    $region7: #{tpu_custom_call.1} parent=1 // pred_check_branch
      %25 = sbr.rel (0) target = $region9
    $region8: #{tpu_custom_call.1} parent=1 // pred_region
      _
    $region9: #{tpu_custom_call.1} parent=1 // pred_fallthru
      _
    // Predicated region
    $region10: #{tpu_custom_call.1} parent=1 // pred_check
      _
    $region11: #{tpu_custom_call.1} parent=1 // pred_check_branch
      %27 = sbr.rel (0) target = $region13
    $region12: #{tpu_custom_call.1} parent=1 // pred_region
      _
    $region13: #{tpu_custom_call.1} parent=1 // pred_fallthru
      _
    // Predicated region
    $region14: #{tpu_custom_call.1} parent=1 // pred_check
      _
    $region15: #{tpu_custom_call.1} parent=1 // pred_check_branch
      %29 = sbr.rel (0) target = $region17
    $region16: #{tpu_custom_call.1} parent=1 // pred_region
      _
    $region17: #{tpu_custom_call.1} parent=1 // pred_fallthru
      _
    // Predicated region
    $region18: #{tpu_custom_call.1} parent=1 // pred_check
      _
    $region19: #{tpu_custom_call.1} parent=1 // pred_check_branch
      %31 = sbr.rel (0) target = $region21
    $region20: #{tpu_custom_call.1} parent=1 // pred_region
      %32 = dma.done [#allocation4], 256
    $region21: #{tpu_custom_call.1} parent=1 // pred_fallthru
      _
    %v33 = vld [vmem:[#allocation3] sm:$0xff]
    %v34 = vld [vmem:[#allocation3 + $0x8] sm:$0xff]
    %v35 = vld [vmem:[%s1] sm:$0x3]
    %v36 = vld [vmem:[%s2] sm:$0x1]
    %s37 = sld [smem:[#allocation2]]
    %v39 = vlaneseq
    %v40 = vshrl.u32 %v39, 7
    %v41 = vsub.s32 0, %v40
    %v42 = vrot.slane %v36, %v41
    %v44 = vmul.f32 %v33, %v42
    %v45 = vmul.f32 %v34, %v42
    %46 = vadd.xlane.f32.xlu0 %v44
    %v47 = vpop.xlane.xlu0 %46
    %48 = vadd.xlane.f32.xlu0 %v45
    %v49 = vpop.xlane.xlu0 %48
    %v50 = vstv %s37
    %v51 = vadd.f32 %v47, %v50
    %v52 = vadd.f32 %v49, %v50
    %v54 = vlaneseq
    %v55 = vshrl.u32 %v54, 7
    %v56 = vsub.s32 0, %v55
    %v57 = vrot.slane %v35, %v56
    %59 = vbcast.lane.b32.xlu0 %v57, 256
    %v60 = vpop.permute.xlu0 %59
    %v61 = vlaneseq
    %v62 = vshrl.u32 %v61, 7
    %v63 = vsub.s32 1, %v62
    %v64 = vrot.slane %v35, %v63
    %66 = vbcast.lane.b32.xlu0 %v64, 256
    %v67 = vpop.permute.xlu0 %66
    %v70 = vmul.f32 %v51, %v60
    %v71 = vmul.f32 %v52, %v67
    %74 = vset.pattern.permute.xlu0 0
    %75 = vperm.xlu0 %74, %v70
    %v76 = vpop.permute.xlu0 %75
    %77 = vset.pattern.permute.xlu0 0
    %78 = vperm.xlu0 %77, %v71
    %v79 = vpop.permute.xlu0 %78
    %v80 = vlaneseq
    %v81 = vand.u32 %v80, 127
    %v82 = vlaneseq
    %v83 = vshrl.u32 %v82, 7
    %v84 = vsub.s32 %v81, %v83
    %v85 = vrot.slane %v76, %v84
    %v86 = vlaneseq
    %v87 = vshrl.u32 %v86, 7
    %v88 = vsub.s32 %v81, %v87
    %v89 = vrot.slane %v79, %v88
    %vm90 = vcmask 1041409
    %v91 = vsel %vm90, %v89, %v85
    %vm93 = vcmask 58368
    %v94 = vsel %vm93, %v91, -inf
    %95 = vmax.xlane.f32.xlu0 %v94
    %v96 = vpop.xlane.xlu0 %95
    %v98 = vlaneseq
    %v99 = vshrl.u32 %v98, 7
    %v100 = vsub.s32 0, %v99
    %v101 = vrot.slane %v96, %v100
    %v102 = vlaneseq
    %v103 = vshrl.u32 %v102, 7
    %v104 = vsub.s32 1, %v103
    %v105 = vrot.slane %v96, %v104
    %v108 = vsub.f32 %v70, %v101
    %v109 = vsub.f32 %v71, %v105
    %v110 = vmul.f32 %v108, 1.442695
    %v111 = vpow.pop %v110
    %v112 = vmul.f32 %v109, 1.442695
    %v113 = vpow.pop %v112
    %116 = vset.pattern.permute.xlu0 0
    %117 = vperm.xlu0 %116, %v111
    %v118 = vpop.permute.xlu0 %117
    %119 = vset.pattern.permute.xlu0 0
    %120 = vperm.xlu0 %119, %v113
    %v121 = vpop.permute.xlu0 %120
    %v122 = vlaneseq
    %v123 = vshrl.u32 %v122, 7
    %v124 = vsub.s32 %v81, %v123
    %v125 = vrot.slane %v118, %v124
    %v126 = vlaneseq
    %v127 = vshrl.u32 %v126, 7
    %v128 = vsub.s32 %v81, %v127
    %v129 = vrot.slane %v121, %v128
    %v130 = vsel %vm90, %v129, %v125
    %v132 = vsel %vm93, %v130, 0.0
    %133 = vadd.xlane.f32.xlu0 %v132
    %v134 = vpop.xlane.xlu0 %133
    %v136 = vlaneseq
    %v137 = vshrl.u32 %v136, 7
    %v138 = vsub.s32 0, %v137
    %v139 = vrot.slane %v134, %v138
    %v140 = vlaneseq
    %v141 = vshrl.u32 %v140, 7
    %v142 = vsub.s32 1, %v141
    %v143 = vrot.slane %v134, %v142
    %v146 = vrcp.pop %v139
    %v147 = vmul.f32 %v111, %v146
    %v148 = vrcp.pop %v143
    %v149 = vmul.f32 %v113, %v148
    %v150 = vmul.f32 %v147, %v60
    %v151 = vmul.f32 %v149, %v67
    %154 = vset.pattern.permute.xlu0 0
    %155 = vperm.xlu0 %154, %v150
    %v156 = vpop.permute.xlu0 %155
    %157 = vset.pattern.permute.xlu0 0
    %158 = vperm.xlu0 %157, %v151
    %v159 = vpop.permute.xlu0 %158
    %v160 = vlaneseq
    %v161 = vshrl.u32 %v160, 7
    %v162 = vsub.s32 %v81, %v161
    %v163 = vrot.slane %v156, %v162
    %v164 = vlaneseq
    %v165 = vshrl.u32 %v164, 7
    %v166 = vsub.s32 %v81, %v165
    %v167 = vrot.slane %v159, %v166
    %v168 = vsel %vm90, %v167, %v163
    %v170 = vsel %vm93, %v168, 0.0
    %171 = vadd.xlane.f32.xlu0 %v170
    %v172 = vpop.xlane.xlu0 %171
    %v173 = vadd.f32 %v172, 1e-13
    %v175 = vlaneseq
    %v176 = vshrl.u32 %v175, 7
    %v177 = vsub.s32 0, %v176
    %v178 = vrot.slane %v173, %v177
    %v179 = vlaneseq
    %v180 = vshrl.u32 %v179, 7
    %v181 = vsub.s32 1, %v180
    %v182 = vrot.slane %v173, %v181
    %v185 = vrcp.pop %v178
    %v186 = vmul.f32 %v150, %v185
    %v187 = vrcp.pop %v182
    %v188 = vmul.f32 %v151, %v187
    %190 = vset.pattern.permute.xlu0 0
    %191 = vperm.xlu0 %190, %v186
    %v192 = vpop.permute.xlu0 %191
    %v193 = vlaneseq
    %v194 = vshrl.u32 %v193, 7
    %v195 = vsub.s32 %v81, %v194
    %v196 = vrot.slane %v192, %v195
    %vm197 = vcmask 64512
    %v198 = vsel %vm197, %v196, 0
    %200 = vmatprep.subr.mxu0 0.0
    %201 = vmatpush1.msra.mxu0 %v33
    %202 = vmatprep.subr.mxu0 0.0
    %203 = vmatpush1.msra.mxu0 0.0
    %204 = vmatprep.subr.mxu0 0.0
    %205 = vmatpush1.msra.mxu0 0.0
    %206 = vmatprep.subr.mxu0 0.0
    %207 = vmatpush1.msra.mxu0 0.0
    %208 = vmatprep.subr.mxu0 0.0
    %209 = vmatpush1.msra.mxu0 0.0
    %210 = vmatprep.subr.mxu0 0.0
    %211 = vmatpush1.msra.mxu0 0.0
    %212 = vmatprep.subr.mxu0 0.0
    %213 = vmatpush1.msra.mxu0 0.0
    %214 = vmatprep.subr.mxu0 0.0
    %215 = vmatpush1.msra.mxu0 0.0
    %216 = vmatprep.subr.mxu0 0.0
    %217 = vmatpush1.msra.mxu0 0.0
    %218 = vmatprep.subr.mxu0 0.0
    %219 = vmatpush1.msra.mxu0 0.0
    %220 = vmatprep.subr.mxu0 0.0
    %221 = vmatpush1.msra.mxu0 0.0
    %222 = vmatprep.subr.mxu0 0.0
    %223 = vmatpush1.msra.mxu0 0.0
    %224 = vmatprep.subr.mxu0 0.0
    %225 = vmatpush1.msra.mxu0 0.0
    %226 = vmatprep.subr.mxu0 0.0
    %227 = vmatpush1.msra.mxu0 0.0
    %228 = vmatprep.subr.mxu0 0.0
    %229 = vmatpush1.msra.mxu0 0.0
    %230 = vmatprep.subr.mxu0 0.0
    %231 = vmatpush1.msra.mxu0 0.0
    %232 = vmatprep.subr.mxu0 0.0
    %233 = vmatpush1.msra.mxu0 0.0
    %234 = vmatprep.subr.mxu0 0.0
    %235 = vmatpush1.msra.mxu0 0.0
    %236 = vmatprep.subr.mxu0 0.0
    %237 = vmatpush1.msra.mxu0 0.0
    %238 = vmatprep.subr.mxu0 0.0
    %239 = vmatpush1.msra.mxu0 0.0
    %240 = vmatprep.subr.mxu0 0.0
    %241 = vmatpush1.msra.mxu0 0.0
    %242 = vmatprep.subr.mxu0 0.0
    %243 = vmatpush1.msra.mxu0 0.0
    %244 = vmatprep.subr.mxu0 0.0
    %245 = vmatpush1.msra.mxu0 0.0
    %246 = vmatprep.subr.mxu0 0.0
    %247 = vmatpush1.msra.mxu0 0.0
    %248 = vmatprep.subr.mxu0 0.0
    %249 = vmatpush1.msra.mxu0 0.0
    %250 = vmatprep.subr.mxu0 0.0
    %251 = vmatpush1.msra.mxu0 0.0
    %252 = vmatprep.subr.mxu0 0.0
    %253 = vmatpush1.msra.mxu0 0.0
    %254 = vmatprep.subr.mxu0 0.0
    %255 = vmatpush1.msra.mxu0 0.0
    %256 = vmatprep.subr.mxu0 0.0
    %257 = vmatpush1.msra.mxu0 0.0
    %258 = vmatprep.subr.mxu0 0.0
    %259 = vmatpush1.msra.mxu0 0.0
    %260 = vmatprep.subr.mxu0 0.0
    %261 = vmatpush1.msra.mxu0 0.0
    %262 = vmatprep.subr.mxu0 0.0
    %263 = vmatpush1.msra.mxu0 0.0
    %264 = vmatprep.mubr.f32.mxu0 0.0
    %265 = vmatmul.mubr.f32.gmra.mrb[0].mxu0 %v198
    %v266 = vpop.f32.mrb[0].mxu0
    %v267 = vadd.f32 0.0, %v266
    %v268 = vpop.f32.mrb[0].mxu0
    %269 = vdwg.mxu0
    %271 = vset.pattern.permute.xlu0 0
    %272 = vperm.xlu0 %271, %v188
    %v273 = vpop.permute.xlu0 %272
    %v274 = vlaneseq
    %v275 = vshrl.u32 %v274, 7
    %v276 = vsub.s32 %v81, %v275
    %v277 = vrot.slane %v273, %v276
    %v278 = vsel %vm197, %v277, 0
    %280 = vmatprep.subr.mxu0 0.0
    %281 = vmatpush1.msra.mxu0 %v34
    %282 = vmatprep.subr.mxu0 0.0
    %283 = vmatpush1.msra.mxu0 0.0
    %284 = vmatprep.subr.mxu0 0.0
    %285 = vmatpush1.msra.mxu0 0.0
    %286 = vmatprep.subr.mxu0 0.0
    %287 = vmatpush1.msra.mxu0 0.0
    %288 = vmatprep.subr.mxu0 0.0
    %289 = vmatpush1.msra.mxu0 0.0
    %290 = vmatprep.subr.mxu0 0.0
    %291 = vmatpush1.msra.mxu0 0.0
    %292 = vmatprep.subr.mxu0 0.0
    %293 = vmatpush1.msra.mxu0 0.0
    %294 = vmatprep.subr.mxu0 0.0
    %295 = vmatpush1.msra.mxu0 0.0
    %296 = vmatprep.subr.mxu0 0.0
    %297 = vmatpush1.msra.mxu0 0.0
    %298 = vmatprep.subr.mxu0 0.0
    %299 = vmatpush1.msra.mxu0 0.0
    %300 = vmatprep.subr.mxu0 0.0
    %301 = vmatpush1.msra.mxu0 0.0
    %302 = vmatprep.subr.mxu0 0.0
    %303 = vmatpush1.msra.mxu0 0.0
    %304 = vmatprep.subr.mxu0 0.0
    %305 = vmatpush1.msra.mxu0 0.0
    %306 = vmatprep.subr.mxu0 0.0
    %307 = vmatpush1.msra.mxu0 0.0
    %308 = vmatprep.subr.mxu0 0.0
    %309 = vmatpush1.msra.mxu0 0.0
    %310 = vmatprep.subr.mxu0 0.0
    %311 = vmatpush1.msra.mxu0 0.0
    %312 = vmatprep.subr.mxu0 0.0
    %313 = vmatpush1.msra.mxu0 0.0
    %314 = vmatprep.subr.mxu0 0.0
    %315 = vmatpush1.msra.mxu0 0.0
    %316 = vmatprep.subr.mxu0 0.0
    %317 = vmatpush1.msra.mxu0 0.0
    %318 = vmatprep.subr.mxu0 0.0
    %319 = vmatpush1.msra.mxu0 0.0
    %320 = vmatprep.subr.mxu0 0.0
    %321 = vmatpush1.msra.mxu0 0.0
    %322 = vmatprep.subr.mxu0 0.0
    %323 = vmatpush1.msra.mxu0 0.0
    %324 = vmatprep.subr.mxu0 0.0
    %325 = vmatpush1.msra.mxu0 0.0
    %326 = vmatprep.subr.mxu0 0.0
    %327 = vmatpush1.msra.mxu0 0.0
    %328 = vmatprep.subr.mxu0 0.0
    %329 = vmatpush1.msra.mxu0 0.0
    %330 = vmatprep.subr.mxu0 0.0
    %331 = vmatpush1.msra.mxu0 0.0
    %332 = vmatprep.subr.mxu0 0.0
    %333 = vmatpush1.msra.mxu0 0.0
    %334 = vmatprep.subr.mxu0 0.0
    %335 = vmatpush1.msra.mxu0 0.0
    %336 = vmatprep.subr.mxu0 0.0
    %337 = vmatpush1.msra.mxu0 0.0
    %338 = vmatprep.subr.mxu0 0.0
    %339 = vmatpush1.msra.mxu0 0.0
    %340 = vmatprep.subr.mxu0 0.0
    %341 = vmatpush1.msra.mxu0 0.0
    %342 = vmatprep.subr.mxu0 0.0
    %343 = vmatpush1.msra.mxu0 0.0
    %344 = vmatprep.mubr.f32.mxu0 0.0
    %345 = vmatmul.mubr.f32.gmra.mrb[0].mxu0 %v278
    %v346 = vpop.f32.mrb[0].mxu0
    %v347 = vadd.f32 0.0, %v346
    %v348 = vpop.f32.mrb[0].mxu0
    %349 = vdwg.mxu0
    %v352 = vrot.slane %v347, 7
    %v353 = vsel %vm90, %v352, %v267
    %355 = vst [vmem:[#allocation6] sm:$0x3] %v353
    // Predicated region
    $region22: #{tpu_custom_call.1} parent=1 // pred_check
      _
    $region23: #{tpu_custom_call.1} parent=1 // pred_check_branch
      %357 = sbr.rel (0) target = $region25
    $region24: #{tpu_custom_call.1} parent=1 // pred_region
      %s359 = ssub.s32 32, 32
      %360 = vsyncadd [#allocation5], %s359
      %s362 = sshll.u32 [#allocation6], 4
      %s363 = int_to_ptr.vmem [resolvable:$true] %s362
      %365 = dma.vmem_to_hbm [thread:$0]  %s363, 32, %s4, [#allocation5]
    $region25: #{tpu_custom_call.1} parent=1 // pred_fallthru
      _
    // Predicated region
    $region26: #{tpu_custom_call.1} parent=1 // pred_check
      _
    $region27: #{tpu_custom_call.1} parent=1 // pred_check_branch
      %367 = sbr.rel (0) target = $region29
    $region28: #{tpu_custom_call.1} parent=1 // pred_region
      %368 = dma.done [#allocation5], 32
    $region29: #{tpu_custom_call.1} parent=1 // pred_fallthru
      _
    %369 = vsyncpa [#allocation4], 1
    %370 = vsyncpa [#allocation5], 1

</llo_original>
